<compile_context>
chip_gen: v6e
topology: v6e:2x2x1
jax: 0.10.0
libtpu: 0.0.40
codegen_flags: <defaults>
</compile_context>

<pallas_src>
import math

import jax
import jax.numpy as jnp
from jax.experimental import pallas as pl
from jax.experimental.pallas import tpu as pltpu


LATENT = 64          # per-trunk latent width
FUSED = 2 * LATENT   # 128 — fused lane width
TILE_B = 2048        # batch rows per grid step (multiple of 256; ~2.3 MiB/tile double-buffered)


def _round_up(x, m):
    return ((x + m - 1) // m) * m


# --------------------------------------------------------------------------------------
# Pallas kernel: fused MLP extractor + fused heads -> one (TILE_B, 128) output slab
# --------------------------------------------------------------------------------------
def _actor_critic_kernel(obs_ref, w1_ref, b1_ref, w2_ref, b2_ref, wh_ref, bh_ref,
                         out_ref):
    # obs arrives f32; in-kernel bf16 cast is free VPU filler under the MXU.
    obs = obs_ref[...].astype(jnp.bfloat16)                       # (TILE_B, F)

    # ---- fused trunk layer 1: (TILE_B,F)@(F,128) ; lanes 0:64 = pi, 64:128 = vf ----
    h = jnp.tanh(
        jnp.dot(obs, w1_ref[...], preferred_element_type=jnp.float32) + b1_ref[...])

    # ---- fused trunk layer 2: block-diagonal (128,128) keeps trunks independent ----
    latent = jnp.tanh(
        jnp.dot(h.astype(jnp.bfloat16), w2_ref[...],
                preferred_element_type=jnp.float32) + b2_ref[...])

    # ---- fused heads: single (TILE_B,128)@(128,128) full-width MXU pass ----
    # columns: 0:3 dosage logits (latent_pi), 3 dtime pre-act (latent_pi),
    #          4 value (latent_vf), 5:128 zero padding.
    head = (jnp.dot(latent.astype(jnp.bfloat16), wh_ref[...],
                    preferred_element_type=jnp.float32) + bh_ref[...])

    # Raw pre-activations only; softplus is applied in the wrapper on the single
    # (B,1) dtime column (avoids wasting the single EUP slot on 127 dead lanes).
    out_ref[...] = head                                            # (TILE_B, 128) f32, unmasked vst


def run_actor_critic_kernel(obs, fused_params, *, tile_b=TILE_B):
    """obs: (B, F) f32.  fused_params: (w1, b1, w2, b2, wh, bh) with bf16 matmul weights."""
    B, F = obs.shape
    w1, b1, w2, b2, wh, bh = fused_params

    # Round small batches up to a multiple of 16 (bf16 sublane packing for the MXU LHS).
    tile_b = min(tile_b, _round_up(B, 16))
    b_pad = _round_up(B, tile_b)
    if b_pad != B:
        obs = jnp.pad(obs, ((0, b_pad - B), (0, 0)))

    grid = (b_pad // tile_b,)

    flops = 2 * b_pad * (F * FUSED + FUSED * FUSED + FUSED * FUSED)
    transcendentals = 2 * b_pad * FUSED             # two full-width tanh passes
    bytes_accessed = int(
        b_pad * F * 4                               # f32 obs (cast happens in-kernel)
        + sum(int(p.size) * p.dtype.itemsize for p in fused_params)
        + b_pad * FUSED * 4)                        # f32 output slab
    # TODO(synk): for v5e (HBM-writeback bound at large B) consider a bf16 or
    # channel-major (8, B) output slab to cut the mostly-zero 512 B/row writeback.

    slab = pl.pallas_call(
        _actor_critic_kernel,
        out_shape=jax.ShapeDtypeStruct((b_pad, FUSED), jnp.float32),
        grid=grid,
        in_specs=[
            pl.BlockSpec((tile_b, F), lambda i: (i, 0)),       # obs: streamed per tile
            pl.BlockSpec(w1.shape, lambda i: (0, 0)),          # weights/biases: VMEM-resident
            pl.BlockSpec(b1.shape, lambda i: (0, 0)),
            pl.BlockSpec(w2.shape, lambda i: (0, 0)),
            pl.BlockSpec(b2.shape, lambda i: (0, 0)),
            pl.BlockSpec(wh.shape, lambda i: (0, 0)),
            pl.BlockSpec(bh.shape, lambda i: (0, 0)),
        ],
        out_specs=pl.BlockSpec((tile_b, FUSED), lambda i: (i, 0)),
        compiler_params=pltpu.CompilerParams(
            dimension_semantics=("parallel",),                 # megacore split on v7x
        ),
        cost_estimate=pl.CostEstimate(flops=flops,
                                      transcendentals=transcendentals,
                                      bytes_accessed=bytes_accessed),
    )(obs, *fused_params)
    return slab[:B]


# --------------------------------------------------------------------------------------
# Deterministic parameter init (orthogonal, mirroring the module's ortho_init)
# --------------------------------------------------------------------------------------
def _orthogonal(key, shape, gain):
    rows, cols = shape
    n = max(rows, cols)
    a = jax.random.normal(key, (n, n), dtype=jnp.float32)
    q, r = jnp.linalg.qr(a)
    q = q * jnp.sign(jnp.diag(r))[None, :]
    return (gain * q[:rows, :cols]).astype(jnp.float32)


def init_params(key, feature_dim):
    ks = jax.random.split(key, 8)
    sqrt2 = math.sqrt(2.0)
    # policy trunk
    w1p = _orthogonal(ks[0], (feature_dim, LATENT), sqrt2); b1p = jnp.zeros((1, LATENT), jnp.float32)
    w2p = _orthogonal(ks[1], (LATENT, LATENT), sqrt2);      b2p = jnp.zeros((1, LATENT), jnp.float32)
    # value trunk
    w1v = _orthogonal(ks[2], (feature_dim, LATENT), sqrt2); b1v = jnp.zeros((1, LATENT), jnp.float32)
    w2v = _orthogonal(ks[3], (LATENT, LATENT), sqrt2);      b2v = jnp.zeros((1, LATENT), jnp.float32)
    # heads
    wd = _orthogonal(ks[4], (LATENT, 3), 0.01);  bd = jnp.zeros((1, 3), jnp.float32)
    wt = _orthogonal(ks[5], (LATENT, 1), 0.01);  bt = jnp.zeros((1, 1), jnp.float32)
    wv = _orthogonal(ks[6], (LATENT, 1), 1.0);   bv = jnp.zeros((1, 1), jnp.float32)
    log_std = jnp.zeros((1,), jnp.float32)       # log_std_init = 0.0
    params = (w1p, b1p, w2p, b2p, w1v, b1v, w2v, b2v, wd, bd, wt, bt, wv, bv)
    return params, log_std


def fuse_params(params):
    """Host-side weight fusion: concat / block-diag / pad, then cast matmul weights to bf16."""
    (w1p, b1p, w2p, b2p, w1v, b1v, w2v, b2v, wd, bd, wt, bt, wv, bv) = params

    w1 = jnp.concatenate([w1p, w1v], axis=1)                    # (F, 128)
    b1 = jnp.concatenate([b1p, b1v], axis=1)                    # (1, 128)

    w2 = jnp.zeros((FUSED, FUSED), jnp.float32)
    w2 = w2.at[:LATENT, :LATENT].set(w2p).at[LATENT:, LATENT:].set(w2v)   # block-diag
    b2 = jnp.concatenate([b2p, b2v], axis=1)                    # (1, 128)

    wh = jnp.zeros((FUSED, FUSED), jnp.float32)
    wh = (wh.at[:LATENT, 0:3].set(wd)                           # dosage logits <- latent_pi
            .at[:LATENT, 3:4].set(wt)                           # dtime pre-act <- latent_pi
            .at[LATENT:, 4:5].set(wv))                          # value         <- latent_vf
    bh = jnp.zeros((1, FUSED), jnp.float32)
    bh = bh.at[:, 0:3].set(bd).at[:, 3:4].set(bt).at[:, 4:5].set(bv)

    # MXU operands in bf16 (f32 accumulation in-kernel); biases stay f32.
    return (w1.astype(jnp.bfloat16), b1,
            w2.astype(jnp.bfloat16), b2,
            wh.astype(jnp.bfloat16), bh)


# --------------------------------------------------------------------------------------
# Full forward pass (kernel + sampling / log-prob glue)
# --------------------------------------------------------------------------------------
def forward(obs, fused_params, log_std, key):
    slab = run_actor_critic_kernel(obs, fused_params)            # (B, 128)
    dosage_logits = slab[:, 0:3]                                 # (B, 3)
    dtime = jax.nn.softplus(slab[:, 3:4])                        # (B, 1) softplus mean
    values = slab[:, 4:5]                                        # (B, 1)

    std = jnp.exp(log_std)                                       # (1,)
    key_eps, key_cat = jax.random.split(key)

    # dtime_dist.rsample()
    eps = jax.random.normal(key_eps, dtime.shape, dtype=jnp.float32)
    action_dtime = dtime + std * eps                             # (B, 1)

    # dosage sample: analogue of [np.random.choice(3, 1, p=p_) for p_ in softmax(logits)]
    dosage_idx = jax.random.categorical(key_cat, dosage_logits, axis=-1)      # (B,)
    action_dosage = dosage_idx[:, None].astype(jnp.float32)                   # (B, 1)

    actions = jnp.concatenate([action_dosage, action_dtime], axis=1)          # (B, 2)

    # Normal log-prob of the sampled dtime
    x = actions[:, 1:2]
    var = std ** 2
    logprob_dtime = (-((x - dtime) ** 2) / (2.0 * var)
                     - jnp.log(std)
                     - 0.5 * jnp.log(2.0 * jnp.pi))                           # (B, 1)

    # log prob of the chosen dosage index: logit - logsumexp == log(softmax)[chosen]
    lse = jax.nn.logsumexp(dosage_logits, axis=-1)                            # (B,)
    chosen_logit = jnp.take_along_axis(dosage_logits, dosage_idx[:, None], axis=1)[:, 0]
    logprob_dosage = chosen_logit - lse                                       # (B,)

    # Faithful to the PyTorch module: (B,) + (B,1) -> (B,B) broadcast, then sum over dim=1.
    logprob = logprob_dosage + logprob_dtime                                  # (B, B)
    log_prob = jnp.sum(logprob, axis=1)                                       # (B,)

    return actions, values, log_prob


# --------------------------------------------------------------------------------------
if __name__ == "__main__":
    B = 8             # batch (one env step per row; production should batch >= 512)
    FEATURE_DIM = 16  # np.prod(observation_space.shape)

    root = jax.random.PRNGKey(0)
    k_obs, k_params, k_sample = jax.random.split(root, 3)

    obs = jax.random.normal(k_obs, (B, FEATURE_DIM), dtype=jnp.float32)
    params, log_std = init_params(k_params, FEATURE_DIM)
    fused_params = fuse_params(params)

    actions, values, log_prob = forward(obs, fused_params, log_std, k_sample)
    jax.block_until_ready((actions, values, log_prob))

    assert actions.shape == (B, 2)
    assert values.shape == (B, 1)
    assert log_prob.shape == (B,)
    assert bool(jnp.all(jnp.isfinite(actions)))
    assert bool(jnp.all(jnp.isfinite(values)))
    assert bool(jnp.all(jnp.isfinite(log_prob)))
    print("KERNEL_OK")
</pallas_src>

<mosaic_0001>
module attributes {stable_mosaic.version = 11 : i64} {
  func.func @_actor_critic_kernel(%arg0: i32, %arg1: memref<16x16xf32, #tpu.memory_space<vmem>>, %arg2: memref<16x128xbf16, #tpu.memory_space<vmem>>, %arg3: memref<1x128xf32, #tpu.memory_space<vmem>>, %arg4: memref<128x128xbf16, #tpu.memory_space<vmem>>, %arg5: memref<1x128xf32, #tpu.memory_space<vmem>>, %arg6: memref<128x128xbf16, #tpu.memory_space<vmem>>, %arg7: memref<1x128xf32, #tpu.memory_space<vmem>>, %arg8: memref<16x128xf32, #tpu.memory_space<vmem>>) attributes {dimension_semantics = [#tpu.dimension_semantics<parallel>], iteration_bounds = array<i64: 1>, scalar_prefetch = 0 : i64, scratch_operands = 0 : i64, tpu.core_type = #tpu.core_type<tc>, window_params = [{transform_indices = @transform_0, window_bounds = array<i64: 16, 16>}, {pipeline_mode = #tpu.pipeline_mode<synchronous>, transform_indices = @transform_1, window_bounds = array<i64: 16, 128>}, {pipeline_mode = #tpu.pipeline_mode<synchronous>, transform_indices = @transform_2, window_bounds = array<i64: 1, 128>}, {pipeline_mode = #tpu.pipeline_mode<synchronous>, transform_indices = @transform_3, window_bounds = array<i64: 128, 128>}, {pipeline_mode = #tpu.pipeline_mode<synchronous>, transform_indices = @transform_4, window_bounds = array<i64: 1, 128>}, {pipeline_mode = #tpu.pipeline_mode<synchronous>, transform_indices = @transform_5, window_bounds = array<i64: 128, 128>}, {pipeline_mode = #tpu.pipeline_mode<synchronous>, transform_indices = @transform_6, window_bounds = array<i64: 1, 128>}, {transform_indices = @transform_7, window_bounds = array<i64: 16, 128>}]} {
    %c0 = arith.constant 0 : index
    %c0_0 = arith.constant 0 : index
    %0 = vector.load %arg1[%c0, %c0_0] : memref<16x16xf32, #tpu.memory_space<vmem>>, vector<16x16xf32>
    %1 = arith.truncf %0 : vector<16x16xf32> to vector<16x16xbf16>
    %c0_1 = arith.constant 0 : index
    %c0_2 = arith.constant 0 : index
    %2 = vector.load %arg2[%c0_1, %c0_2] : memref<16x128xbf16, #tpu.memory_space<vmem>>, vector<16x128xbf16>
    %cst = arith.constant dense<0.000000e+00> : vector<16x128xf32>
    %3 = tpu.matmul %1, %2, %cst {dimension_numbers = #tpu.dot_dimension_numbers<[1], [0], [0], [1], [0, 0, 1, 1], [], []>} : vector<16x16xbf16>, vector<16x128xbf16>, vector<16x128xf32> -> vector<16x128xf32>
    %c0_3 = arith.constant 0 : index
    %c0_4 = arith.constant 0 : index
    %4 = vector.load %arg3[%c0_3, %c0_4] : memref<1x128xf32, #tpu.memory_space<vmem>>, vector<1x128xf32>
    %5 = vector.broadcast %4 : vector<1x128xf32> to vector<16x128xf32>
    %6 = arith.addf %3, %5 : vector<16x128xf32>
    %7 = math.tanh %6 : vector<16x128xf32>
    %8 = arith.truncf %7 : vector<16x128xf32> to vector<16x128xbf16>
    %c0_5 = arith.constant 0 : index
    %c0_6 = arith.constant 0 : index
    %9 = vector.load %arg4[%c0_5, %c0_6] : memref<128x128xbf16, #tpu.memory_space<vmem>>, vector<128x128xbf16>
    %cst_7 = arith.constant dense<0.000000e+00> : vector<16x128xf32>
    %10 = tpu.matmul %8, %9, %cst_7 {dimension_numbers = #tpu.dot_dimension_numbers<[1], [0], [0], [1], [0, 0, 1, 1], [], []>} : vector<16x128xbf16>, vector<128x128xbf16>, vector<16x128xf32> -> vector<16x128xf32>
    %c0_8 = arith.constant 0 : index
    %c0_9 = arith.constant 0 : index
    %11 = vector.load %arg5[%c0_8, %c0_9] : memref<1x128xf32, #tpu.memory_space<vmem>>, vector<1x128xf32>
    %12 = vector.broadcast %11 : vector<1x128xf32> to vector<16x128xf32>
    %13 = arith.addf %10, %12 : vector<16x128xf32>
    %14 = math.tanh %13 : vector<16x128xf32>
    %15 = arith.truncf %14 : vector<16x128xf32> to vector<16x128xbf16>
    %c0_10 = arith.constant 0 : index
    %c0_11 = arith.constant 0 : index
    %16 = vector.load %arg6[%c0_10, %c0_11] : memref<128x128xbf16, #tpu.memory_space<vmem>>, vector<128x128xbf16>
    %cst_12 = arith.constant dense<0.000000e+00> : vector<16x128xf32>
    %17 = tpu.matmul %15, %16, %cst_12 {dimension_numbers = #tpu.dot_dimension_numbers<[1], [0], [0], [1], [0, 0, 1, 1], [], []>} : vector<16x128xbf16>, vector<128x128xbf16>, vector<16x128xf32> -> vector<16x128xf32>
    %c0_13 = arith.constant 0 : index
    %c0_14 = arith.constant 0 : index
    %18 = vector.load %arg7[%c0_13, %c0_14] : memref<1x128xf32, #tpu.memory_space<vmem>>, vector<1x128xf32>
    %19 = vector.broadcast %18 : vector<1x128xf32> to vector<16x128xf32>
    %20 = arith.addf %17, %19 : vector<16x128xf32>
    %c0_15 = arith.constant 0 : index
    %c0_16 = arith.constant 0 : index
    %21 = vector.load %arg8[%c0_15, %c0_16] : memref<16x128xf32, #tpu.memory_space<vmem>>, vector<16x128xf32>
    tpu.vector_store %arg8[%c0_15, %c0_16], %20 {strides = array<i32>} : memref<16x128xf32, #tpu.memory_space<vmem>>, vector<16x128xf32>,
    return
  }
  func.func @transform_0(%arg0: i32) -> (i32, i32) {
    %c0_i32 = arith.constant 0 : i32
    %c0_i32_0 = arith.constant 0 : i32
    return %arg0, %c0_i32 : i32, i32
  }
  func.func @transform_1(%arg0: i32) -> (i32, i32) {
    %c0_i32 = arith.constant 0 : i32
    %c0_i32_0 = arith.constant 0 : i32
    %c0_i32_1 = arith.constant 0 : i32
    return %c0_i32, %c0_i32_0 : i32, i32
  }
  func.func @transform_2(%arg0: i32) -> (i32, i32) {
    %c0_i32 = arith.constant 0 : i32
    %c0_i32_0 = arith.constant 0 : i32
    %c0_i32_1 = arith.constant 0 : i32
    return %c0_i32, %c0_i32_0 : i32, i32
  }
  func.func @transform_3(%arg0: i32) -> (i32, i32) {
    %c0_i32 = arith.constant 0 : i32
    %c0_i32_0 = arith.constant 0 : i32
    %c0_i32_1 = arith.constant 0 : i32
    return %c0_i32, %c0_i32_0 : i32, i32
  }
  func.func @transform_4(%arg0: i32) -> (i32, i32) {
    %c0_i32 = arith.constant 0 : i32
    %c0_i32_0 = arith.constant 0 : i32
    %c0_i32_1 = arith.constant 0 : i32
    return %c0_i32, %c0_i32_0 : i32, i32
  }
  func.func @transform_5(%arg0: i32) -> (i32, i32) {
    %c0_i32 = arith.constant 0 : i32
    %c0_i32_0 = arith.constant 0 : i32
    %c0_i32_1 = arith.constant 0 : i32
    return %c0_i32, %c0_i32_0 : i32, i32
  }
  func.func @transform_6(%arg0: i32) -> (i32, i32) {
    %c0_i32 = arith.constant 0 : i32
    %c0_i32_0 = arith.constant 0 : i32
    %c0_i32_1 = arith.constant 0 : i32
    return %c0_i32, %c0_i32_0 : i32, i32
  }
  func.func @transform_7(%arg0: i32) -> (i32, i32) {
    %c0_i32 = arith.constant 0 : i32
    %c0_i32_0 = arith.constant 0 : i32
    return %arg0, %c0_i32 : i32, i32
  }
}

</mosaic_0001>

<llo_original>
// kernel: tpu_custom_call.1
$region0: #{tpu_custom_call.1}
  #allocation0 [shape = 'u32[]', space=smem, size = 0x4, offset = 0x4, fixed_abs, tag = 'smem constant byte address 0x4 - core index']
  #allocation1 [shape = 'u32[144,128]{1,0:T(1,128)}', space=vmem, size = 0x12000, scoped, tag = 'internal scratch']
  %s0 = inlined_call_operand.hbm [shape: f32[16,16], index: 0, kind: input, shape index: {}]
  %s1 = inlined_call_operand.hbm [shape: bf16[16,128], index: 1, kind: input, shape index: {}]
  %s2 = inlined_call_operand.vmem [shape: f32[1,128], index: 2, kind: input, shape index: {}]
  %s3 = inlined_call_operand.hbm [shape: bf16[128,128], index: 3, kind: input, shape index: {}]
  %s4 = inlined_call_operand.vmem [shape: f32[1,128], index: 4, kind: input, shape index: {}]
  %s5 = inlined_call_operand.hbm [shape: bf16[128,128], index: 5, kind: input, shape index: {}]
  %s6 = inlined_call_operand.vmem [shape: f32[1,128], index: 6, kind: input, shape index: {}]
  %s7 = inlined_call_operand.hbm [shape: f32[16,128], index: 7, kind: output, shape index: {}]
  %s8 = sld [smem:[#allocation0]]
  $region54: #{tpu_custom_call.1} parent=0
    _
  %s10 = ssub.s32 1, %s8
  %s11 = scalar_select 0, %s10, %s8
  $region1: #{tpu_custom_call.1} parent=0
    #allocation2 [shape = 'u8[8192]{0}', space=vmem, size = 0x2000, scoped, tag = 'input window, operand 0, single buffered']
    #allocation3 [shape = 's32[1]{0}', space=sflag, size = 0x4, scoped, tag = 'scoped memory for tpu_custom_call.1']
    #allocation4 [shape = 's32[1]{0}', space=sflag, size = 0x4, scoped, tag = 'scoped memory for tpu_custom_call.1']
    #allocation5 [shape = 'u8[4096]{0}', space=vmem, size = 0x1000, scoped, tag = 'input window, operand 1, single buffered']
    #allocation6 [shape = 's32[1]{0}', space=sflag, size = 0x4, scoped, tag = 'scoped memory for tpu_custom_call.1']
    #allocation7 [shape = 'u8[32768]{0}', space=vmem, size = 0x8000, scoped, tag = 'input window, operand 3, single buffered']
    #allocation8 [shape = 'u8[32768]{0}', space=vmem, size = 0x8000, scoped, tag = 'input window, operand 5, single buffered']
    #allocation9 [shape = 's32[1]{0}', space=sflag, size = 0x4, scoped, tag = 'scoped memory for tpu_custom_call.1']
    #allocation10 [shape = 'u8[8192]{0}', space=vmem, size = 0x2000, scoped, tag = 'output window, operand 0, single buffered']
    %12 = vsyncpa [#allocation3], 0
    %13 = vsyncpa [#allocation6], 0
    %14 = vsyncpa [#allocation9], 0
    %15 = vsyncpa [#allocation4], 0
    // Predicated region
    $region2: #{tpu_custom_call.1} parent=1 // pred_check
      _
    $region3: #{tpu_custom_call.1} parent=1 // pred_check_branch
      %17 = sbr.rel (0) target = $region5
    $region4: #{tpu_custom_call.1} parent=1 // pred_region
      %s19 = ssub.s32 256, 256
      %20 = vsyncadd [#allocation3], %s19
      %s21 = sshll.u32 [#allocation2], 4
      %s22 = int_to_ptr.vmem [resolvable:$true] %s21
      %27 = dma.hbm_to_vmem [thread:$0]  %s0, 256, %s22, [#allocation3], 128, 128, 8
    $region5: #{tpu_custom_call.1} parent=1 // pred_fallthru
      _
    // Predicated region
    $region6: #{tpu_custom_call.1} parent=1 // pred_check
      _
    $region7: #{tpu_custom_call.1} parent=1 // pred_check_branch
      %29 = sbr.rel (0) target = $region9
    $region8: #{tpu_custom_call.1} parent=1 // pred_region
      %s31 = ssub.s32 128, 128
      %32 = vsyncadd [#allocation6], %s31
      %s33 = sshll.u32 [#allocation5], 4
      %s34 = int_to_ptr.vmem [resolvable:$true] %s33
      %39 = dma.hbm_to_vmem [thread:$0]  %s1, 128, %s34, [#allocation6], 64, 64, 4
    $region9: #{tpu_custom_call.1} parent=1 // pred_fallthru
      _
    // Predicated region
    $region10: #{tpu_custom_call.1} parent=1 // pred_check
      _
    $region11: #{tpu_custom_call.1} parent=1 // pred_check_branch
      %41 = sbr.rel (0) target = $region13
    $region12: #{tpu_custom_call.1} parent=1 // pred_region
      _
    $region13: #{tpu_custom_call.1} parent=1 // pred_fallthru
      _
    // Predicated region
    $region14: #{tpu_custom_call.1} parent=1 // pred_check
      _
    $region15: #{tpu_custom_call.1} parent=1 // pred_check_branch
      %43 = sbr.rel (0) target = $region17
    $region16: #{tpu_custom_call.1} parent=1 // pred_region
      %s45 = ssub.s32 1024, 1024
      %46 = vsyncadd [#allocation6], %s45
      %s47 = sshll.u32 [#allocation7], 4
      %s48 = int_to_ptr.vmem [resolvable:$true] %s47
      %53 = dma.hbm_to_vmem [thread:$0]  %s3, 1024, %s48, [#allocation6], 64, 64, 4
    $region17: #{tpu_custom_call.1} parent=1 // pred_fallthru
      _
    // Predicated region
    $region18: #{tpu_custom_call.1} parent=1 // pred_check
      _
    $region19: #{tpu_custom_call.1} parent=1 // pred_check_branch
      %55 = sbr.rel (0) target = $region21
    $region20: #{tpu_custom_call.1} parent=1 // pred_region
      _
    $region21: #{tpu_custom_call.1} parent=1 // pred_fallthru
      _
    // Predicated region
    $region22: #{tpu_custom_call.1} parent=1 // pred_check
      _
    $region23: #{tpu_custom_call.1} parent=1 // pred_check_branch
      %57 = sbr.rel (0) target = $region25
    $region24: #{tpu_custom_call.1} parent=1 // pred_region
      %s59 = ssub.s32 1024, 1024
      %60 = vsyncadd [#allocation9], %s59
      %s61 = sshll.u32 [#allocation8], 4
      %s62 = int_to_ptr.vmem [resolvable:$true] %s61
      %67 = dma.hbm_to_vmem [thread:$0]  %s5, 1024, %s62, [#allocation9], 64, 64, 4
    $region25: #{tpu_custom_call.1} parent=1 // pred_fallthru
      _
    // Predicated region
    $region26: #{tpu_custom_call.1} parent=1 // pred_check
      _
    $region27: #{tpu_custom_call.1} parent=1 // pred_check_branch
      %69 = sbr.rel (0) target = $region29
    $region28: #{tpu_custom_call.1} parent=1 // pred_region
      _
    $region29: #{tpu_custom_call.1} parent=1 // pred_fallthru
      _
    // Predicated region
    $region30: #{tpu_custom_call.1} parent=1 // pred_check
      _
    $region31: #{tpu_custom_call.1} parent=1 // pred_check_branch
      %71 = sbr.rel (0) target = $region33
    $region32: #{tpu_custom_call.1} parent=1 // pred_region
      %72 = dma.done [#allocation3], 256
    $region33: #{tpu_custom_call.1} parent=1 // pred_fallthru
      _
    // Predicated region
    $region34: #{tpu_custom_call.1} parent=1 // pred_check
      _
    $region35: #{tpu_custom_call.1} parent=1 // pred_check_branch
      %74 = sbr.rel (0) target = $region37
    $region36: #{tpu_custom_call.1} parent=1 // pred_region
      %75 = dma.done [#allocation6], 128
    $region37: #{tpu_custom_call.1} parent=1 // pred_fallthru
      _
    // Predicated region
    $region38: #{tpu_custom_call.1} parent=1 // pred_check
      _
    $region39: #{tpu_custom_call.1} parent=1 // pred_check_branch
      %77 = sbr.rel (0) target = $region41
    $region40: #{tpu_custom_call.1} parent=1 // pred_region
      %78 = dma.done [#allocation6], 1024
    $region41: #{tpu_custom_call.1} parent=1 // pred_fallthru
      _
    // Predicated region
    $region42: #{tpu_custom_call.1} parent=1 // pred_check
      _
    $region43: #{tpu_custom_call.1} parent=1 // pred_check_branch
      %80 = sbr.rel (0) target = $region45
    $region44: #{tpu_custom_call.1} parent=1 // pred_region
      %81 = dma.done [#allocation9], 1024
    $region45: #{tpu_custom_call.1} parent=1 // pred_fallthru
      _
    %v83 = vld [vmem:[#allocation2] sm:$0xff]
    %v84 = vld [vmem:[#allocation2 + $0x8] sm:$0xff]
    %v85 = vpack.c.bf16 %v84, %v83
    %v86 = vld [vmem:[#allocation5] sm:$0xf]
    %v87 = vld [vmem:[#allocation5 + $0x4] sm:$0xf]
    %v88 = vld [vmem:[%s2] sm:$0x1]
    %v90 = vlaneseq
    %v91 = vshrl.u32 %v90, 7
    %v92 = vsub.s32 0, %v91
    %v93 = vrot.slane %v88, %v92
    %v97 = vunpack.c.l.b16 %v86
    %v98 = vunpack.c.l.b16 %v87
    %v99 = vpack.c.b16 %v98, %v97
    %vm101 = vcmask 130048
    %v103 = vsel %vm101, %v85, 0
    %105 = vmatprep.subr.bf16.mxu0 0
    %106 = vmatpush1.bf16.msra.mxu0 0
    %107 = vmatprep.subr.bf16.mxu0 0
    %108 = vmatpush1.bf16.msra.mxu0 0
    %109 = vmatprep.subr.bf16.mxu0 0
    %110 = vmatpush1.bf16.msra.mxu0 0
    %111 = vmatprep.subr.bf16.mxu0 0
    %112 = vmatpush1.bf16.msra.mxu0 0
    %113 = vmatprep.subr.bf16.mxu0 0
    %114 = vmatpush1.bf16.msra.mxu0 0
    %115 = vmatprep.subr.bf16.mxu0 0
    %116 = vmatpush1.bf16.msra.mxu0 0
    %117 = vmatprep.subr.bf16.mxu0 0
    %118 = vmatpush1.bf16.msra.mxu0 0
    %119 = vmatprep.subr.bf16.mxu0 0
    %120 = vmatpush1.bf16.msra.mxu0 %v99
    %121 = vmatprep.subr.bf16.mxu0 0
    %122 = vmatpush2.bf16.msra.mxu0 0
    %123 = vmatprep.subr.bf16.mxu0 0
    %124 = vmatpush2.bf16.msra.mxu0 0
    %125 = vmatprep.subr.bf16.mxu0 0
    %126 = vmatpush2.bf16.msra.mxu0 0
    %127 = vmatprep.subr.bf16.mxu0 0
    %128 = vmatpush2.bf16.msra.mxu0 0
    %129 = vmatprep.subr.bf16.mxu0 0
    %130 = vmatpush2.bf16.msra.mxu0 0
    %131 = vmatprep.subr.bf16.mxu0 0
    %132 = vmatpush2.bf16.msra.mxu0 0
    %133 = vmatprep.subr.bf16.mxu0 0
    %134 = vmatpush2.bf16.msra.mxu0 0
    %135 = vmatprep.subr.bf16.mxu0 0
    %136 = vmatpush2.bf16.msra.mxu0 0
    %137 = vmatprep.mubr.bf16.mxu0 0
    %138 = vmatmul.mubr.bf16.gmra.mxu0 %v103
    %v139 = vpop.f32.mrf.mxu0
    %v140 = vadd.f32 %v93, %v139
    %v141 = vpop.f32.mrf.mxu0
    %v142 = vpop.f32.mrf.mxu0
    %v143 = vadd.f32 %v93, %v142
    %v144 = vpop.f32.mrf.mxu0
    %145 = vdwg.mxu0
    %v146 = vtanh.pop %v140
    %v147 = vtanh.pop %v143
    %v148 = vpack.c.bf16 %v147, %v146
    %v149 = vld [vmem:[#allocation7] sm:$0xf]
    %v150 = vld [vmem:[#allocation7 + $0x4] sm:$0xf]
    %v151 = vld [vmem:[#allocation7 + $0x8] sm:$0xf]
    %v152 = vld [vmem:[#allocation7 + $0xc] sm:$0xf]
    %v153 = vld [vmem:[#allocation7 + $0x10] sm:$0xf]
    %v154 = vld [vmem:[#allocation7 + $0x14] sm:$0xf]
    %v155 = vld [vmem:[#allocation7 + $0x18] sm:$0xf]
    %v156 = vld [vmem:[#allocation7 + $0x1c] sm:$0xf]
    %v157 = vld [vmem:[#allocation7 + $0x20] sm:$0xf]
    %v158 = vld [vmem:[#allocation7 + $0x24] sm:$0xf]
    %v159 = vld [vmem:[#allocation7 + $0x28] sm:$0xf]
    %v160 = vld [vmem:[#allocation7 + $0x2c] sm:$0xf]
    %v161 = vld [vmem:[#allocation7 + $0x30] sm:$0xf]
    %v162 = vld [vmem:[#allocation7 + $0x34] sm:$0xf]
    %v163 = vld [vmem:[#allocation7 + $0x38] sm:$0xf]
    %v164 = vld [vmem:[#allocation7 + $0x3c] sm:$0xf]
    %v165 = vld [vmem:[%s4] sm:$0x1]
    %v167 = vlaneseq
    %v168 = vshrl.u32 %v167, 7
    %v169 = vsub.s32 0, %v168
    %v170 = vrot.slane %v165, %v169
    %v188 = vunpack.c.l.b16 %v149
    %v189 = vunpack.c.l.b16 %v150
    %v190 = vunpack.c.l.b16 %v151
    %v191 = vunpack.c.l.b16 %v152
    %v192 = vunpack.c.l.b16 %v153
    %v193 = vunpack.c.l.b16 %v154
    %v194 = vunpack.c.l.b16 %v155
    %v195 = vunpack.c.l.b16 %v156
    %v196 = vunpack.c.l.b16 %v157
    %v197 = vunpack.c.l.b16 %v158
    %v198 = vunpack.c.l.b16 %v159
    %v199 = vunpack.c.l.b16 %v160
    %v200 = vunpack.c.l.b16 %v161
    %v201 = vunpack.c.l.b16 %v162
    %v202 = vunpack.c.l.b16 %v163
    %v203 = vunpack.c.l.b16 %v164
    %v204 = vpack.c.b16 %v189, %v188
    %v205 = vpack.c.b16 %v191, %v190
    %v206 = vpack.c.b16 %v193, %v192
    %v207 = vpack.c.b16 %v195, %v194
    %v208 = vpack.c.b16 %v197, %v196
    %v209 = vpack.c.b16 %v199, %v198
    %v210 = vpack.c.b16 %v201, %v200
    %v211 = vpack.c.b16 %v203, %v202
    %220 = vmatprep.subr.bf16.mxu0 0
    %221 = vmatpush1.bf16.msra.mxu0 %v211
    %222 = vmatprep.subr.bf16.mxu0 0
    %223 = vmatpush1.bf16.msra.mxu0 %v210
    %224 = vmatprep.subr.bf16.mxu0 0
    %225 = vmatpush1.bf16.msra.mxu0 %v209
    %226 = vmatprep.subr.bf16.mxu0 0
    %227 = vmatpush1.bf16.msra.mxu0 %v208
    %228 = vmatprep.subr.bf16.mxu0 0
    %229 = vmatpush1.bf16.msra.mxu0 %v207
    %230 = vmatprep.subr.bf16.mxu0 0
    %231 = vmatpush1.bf16.msra.mxu0 %v206
    %232 = vmatprep.subr.bf16.mxu0 0
    %233 = vmatpush1.bf16.msra.mxu0 %v205
    %234 = vmatprep.subr.bf16.mxu0 0
    %235 = vmatpush1.bf16.msra.mxu0 %v204
    %236 = vmatprep.subr.bf16.mxu0 0
    %237 = vmatpush2.bf16.msra.mxu0 0
    %238 = vmatprep.subr.bf16.mxu0 0
    %239 = vmatpush2.bf16.msra.mxu0 0
    %240 = vmatprep.subr.bf16.mxu0 0
    %241 = vmatpush2.bf16.msra.mxu0 0
    %242 = vmatprep.subr.bf16.mxu0 0
    %243 = vmatpush2.bf16.msra.mxu0 0
    %244 = vmatprep.subr.bf16.mxu0 0
    %245 = vmatpush2.bf16.msra.mxu0 0
    %246 = vmatprep.subr.bf16.mxu0 0
    %247 = vmatpush2.bf16.msra.mxu0 0
    %248 = vmatprep.subr.bf16.mxu0 0
    %249 = vmatpush2.bf16.msra.mxu0 0
    %250 = vmatprep.subr.bf16.mxu0 0
    %251 = vmatpush2.bf16.msra.mxu0 0
    %252 = vmatprep.mubr.bf16.mxu0 0
    %253 = vmatmul.mubr.bf16.gmra.mxu0 %v148
    %v254 = vpop.f32.mrf.mxu0
    %v255 = vadd.f32 %v170, %v254
    %v256 = vpop.f32.mrf.mxu0
    %v257 = vpop.f32.mrf.mxu0
    %v258 = vadd.f32 %v170, %v257
    %v259 = vpop.f32.mrf.mxu0
    %260 = vdwg.mxu0
    %v261 = vtanh.pop %v255
    %v262 = vtanh.pop %v258
    %v263 = vpack.c.bf16 %v262, %v261
    %v264 = vld [vmem:[#allocation8] sm:$0xf]
    %v265 = vld [vmem:[#allocation8 + $0x4] sm:$0xf]
    %v266 = vld [vmem:[#allocation8 + $0x8] sm:$0xf]
    %v267 = vld [vmem:[#allocation8 + $0xc] sm:$0xf]
    %v268 = vld [vmem:[#allocation8 + $0x10] sm:$0xf]
    %v269 = vld [vmem:[#allocation8 + $0x14] sm:$0xf]
    %v270 = vld [vmem:[#allocation8 + $0x18] sm:$0xf]
    %v271 = vld [vmem:[#allocation8 + $0x1c] sm:$0xf]
    %v272 = vld [vmem:[#allocation8 + $0x20] sm:$0xf]
    %v273 = vld [vmem:[#allocation8 + $0x24] sm:$0xf]
    %v274 = vld [vmem:[#allocation8 + $0x28] sm:$0xf]
    %v275 = vld [vmem:[#allocation8 + $0x2c] sm:$0xf]
    %v276 = vld [vmem:[#allocation8 + $0x30] sm:$0xf]
    %v277 = vld [vmem:[#allocation8 + $0x34] sm:$0xf]
    %v278 = vld [vmem:[#allocation8 + $0x38] sm:$0xf]
    %v279 = vld [vmem:[#allocation8 + $0x3c] sm:$0xf]
    %v280 = vld [vmem:[%s6] sm:$0x1]
    %v282 = vlaneseq
    %v283 = vshrl.u32 %v282, 7
    %v284 = vsub.s32 0, %v283
    %v285 = vrot.slane %v280, %v284
    %v303 = vunpack.c.l.b16 %v264
    %v304 = vunpack.c.l.b16 %v265
    %v305 = vunpack.c.l.b16 %v266
    %v306 = vunpack.c.l.b16 %v267
    %v307 = vunpack.c.l.b16 %v268
    %v308 = vunpack.c.l.b16 %v269
    %v309 = vunpack.c.l.b16 %v270
    %v310 = vunpack.c.l.b16 %v271
    %v311 = vunpack.c.l.b16 %v272
    %v312 = vunpack.c.l.b16 %v273
    %v313 = vunpack.c.l.b16 %v274
    %v314 = vunpack.c.l.b16 %v275
    %v315 = vunpack.c.l.b16 %v276
    %v316 = vunpack.c.l.b16 %v277
    %v317 = vunpack.c.l.b16 %v278
    %v318 = vunpack.c.l.b16 %v279
    %v319 = vpack.c.b16 %v304, %v303
    %v320 = vpack.c.b16 %v306, %v305
    %v321 = vpack.c.b16 %v308, %v307
    %v322 = vpack.c.b16 %v310, %v309
    %v323 = vpack.c.b16 %v312, %v311
    %v324 = vpack.c.b16 %v314, %v313
    %v325 = vpack.c.b16 %v316, %v315
    %v326 = vpack.c.b16 %v318, %v317
    %335 = vmatprep.subr.bf16.mxu0 0
    %336 = vmatpush1.bf16.msra.mxu0 %v326
    %337 = vmatprep.subr.bf16.mxu0 0
    %338 = vmatpush1.bf16.msra.mxu0 %v325
    %339 = vmatprep.subr.bf16.mxu0 0
    %340 = vmatpush1.bf16.msra.mxu0 %v324
    %341 = vmatprep.subr.bf16.mxu0 0
    %342 = vmatpush1.bf16.msra.mxu0 %v323
    %343 = vmatprep.subr.bf16.mxu0 0
    %344 = vmatpush1.bf16.msra.mxu0 %v322
    %345 = vmatprep.subr.bf16.mxu0 0
    %346 = vmatpush1.bf16.msra.mxu0 %v321
    %347 = vmatprep.subr.bf16.mxu0 0
    %348 = vmatpush1.bf16.msra.mxu0 %v320
    %349 = vmatprep.subr.bf16.mxu0 0
    %350 = vmatpush1.bf16.msra.mxu0 %v319
    %351 = vmatprep.subr.bf16.mxu0 0
    %352 = vmatpush2.bf16.msra.mxu0 0
    %353 = vmatprep.subr.bf16.mxu0 0
    %354 = vmatpush2.bf16.msra.mxu0 0
    %355 = vmatprep.subr.bf16.mxu0 0
    %356 = vmatpush2.bf16.msra.mxu0 0
    %357 = vmatprep.subr.bf16.mxu0 0
    %358 = vmatpush2.bf16.msra.mxu0 0
    %359 = vmatprep.subr.bf16.mxu0 0
    %360 = vmatpush2.bf16.msra.mxu0 0
    %361 = vmatprep.subr.bf16.mxu0 0
    %362 = vmatpush2.bf16.msra.mxu0 0
    %363 = vmatprep.subr.bf16.mxu0 0
    %364 = vmatpush2.bf16.msra.mxu0 0
    %365 = vmatprep.subr.bf16.mxu0 0
    %366 = vmatpush2.bf16.msra.mxu0 0
    %367 = vmatprep.mubr.bf16.mxu0 0
    %368 = vmatmul.mubr.bf16.gmra.mxu0 %v263
    %v369 = vpop.f32.mrf.mxu0
    %v370 = vadd.f32 %v285, %v369
    %v371 = vpop.f32.mrf.mxu0
    %v372 = vpop.f32.mrf.mxu0
    %v373 = vadd.f32 %v285, %v372
    %v374 = vpop.f32.mrf.mxu0
    %375 = vdwg.mxu0
    %376 = vst [vmem:[#allocation10] sm:$0xff] %v370
    %377 = vst [vmem:[#allocation10 + $0x8] sm:$0xff] %v373
    // Predicated region
    $region46: #{tpu_custom_call.1} parent=1 // pred_check
      _
    $region47: #{tpu_custom_call.1} parent=1 // pred_check_branch
      %379 = sbr.rel (0) target = $region49
    $region48: #{tpu_custom_call.1} parent=1 // pred_region
      %s381 = ssub.s32 256, 256
      %382 = vsyncadd [#allocation4], %s381
      %s383 = sshll.u32 [#allocation10], 4
      %s384 = int_to_ptr.vmem [resolvable:$true] %s383
      %389 = dma.vmem_to_hbm [thread:$0]  %s384, 256, %s7, [#allocation4], 128, 128, 8
    $region49: #{tpu_custom_call.1} parent=1 // pred_fallthru
      _
    // Predicated region
    $region50: #{tpu_custom_call.1} parent=1 // pred_check
      _
    $region51: #{tpu_custom_call.1} parent=1 // pred_check_branch
      %391 = sbr.rel (0) target = $region53
    $region52: #{tpu_custom_call.1} parent=1 // pred_region
      %392 = dma.done [#allocation4], 256
    $region53: #{tpu_custom_call.1} parent=1 // pred_fallthru
      _
    %393 = vsyncpa [#allocation3], 1
    %394 = vsyncpa [#allocation6], 1
    %395 = vsyncpa [#allocation9], 1
    %396 = vsyncpa [#allocation4], 1

</llo_original>
